<compile_context>
chip_gen: v7x
topology: tpu7x:2x2x1
jax: 0.10.0
libtpu: 0.0.40
codegen_flags: <defaults>
</compile_context>

<pallas_src>
import jax
import jax.numpy as jnp
from jax.experimental import pallas as pl
from jax.experimental.pallas import tpu as pltpu


def critic_mfg_kernel(s_ref, a_ref, m_ref,
                      w1s_ref, w1a_ref, w1m_ref, b1_ref,
                      w2_ref, b2_ref,
                      w3_ref, b3_ref,
                      w4_ref, b4_ref,
                      w5_ref, b5_ref,
                      o_ref):
    # linear1 on the (virtually) concatenated abs(input): abs distributes over
    # the feature concat, so three small MXU pushes into one f32 accumulator.
    h = (jnp.dot(jnp.abs(s_ref[...]), w1s_ref[...], preferred_element_type=jnp.float32)
         + jnp.dot(jnp.abs(a_ref[...]), w1a_ref[...], preferred_element_type=jnp.float32)
         + jnp.dot(jnp.abs(m_ref[...]), w1m_ref[...], preferred_element_type=jnp.float32)
         + b1_ref[...])
    h = jnp.maximum(h, 0.0)

    # linear2..linear4 : Linear + ReLU (MXU matmuls with f32 accumulation)
    h = jnp.maximum(
        jnp.dot(h, w2_ref[...], preferred_element_type=jnp.float32) + b2_ref[...], 0.0)
    h = jnp.maximum(
        jnp.dot(h, w3_ref[...], preferred_element_type=jnp.float32) + b3_ref[...], 0.0)
    h = jnp.maximum(
        jnp.dot(h, w4_ref[...], preferred_element_type=jnp.float32) + b4_ref[...], 0.0)

    # linear5 (hidden -> 1): VPU multiply + XLU cross-lane reduce instead of an
    # N=1 MXU matmul.  w5_ref is the (1, hidden) weight row, b5_ref is a (1, 1)
    # SMEM scalar.
    q = jnp.sum(h * w5_ref[...], axis=-1, keepdims=True) + b5_ref[0, 0]
    o_ref[...] = jnp.abs(q).astype(o_ref.dtype)


def _round_up(x, m):
    return ((x + m - 1) // m) * m


def critic_mfg_forward(state, action, action_mean, params, *, block_m=1024):
    """Pallas-backed forward pass matching Critic_MFG.forward."""
    state = state.astype(jnp.float32)
    action = action.astype(jnp.float32)
    action_mean = action_mean.astype(jnp.float32)

    (w1, b1), (w2, b2), (w3, b3), (w4, b4), (w5, b5) = params
    sd = state.shape[1]
    ad = action.shape[1]
    md = action_mean.shape[1]
    assert w1.shape[0] == sd + ad + md, "linear1 in_features mismatch"
    hidden = w1.shape[1]

    # Split linear1's weight into per-input row slabs (removes the concat).
    w1s, w1a, w1m = w1[:sd], w1[sd:sd + ad], w1[sd + ad:]
    w5_row = w5.reshape(1, hidden)                 # (hidden, 1) -> (1, hidden)
    b5_s = b5.reshape(1, 1).astype(jnp.float32)    # SMEM scalar

    # Batch tiling: big tiles for pipelining, multiple of 8 sublanes (f32).
    batch = state.shape[0]
    tm = min(_round_up(block_m, 8), _round_up(batch, 8))
    padded = _round_up(batch, tm)
    if padded != batch:
        pad = padded - batch
        state = jnp.pad(state, ((0, pad), (0, 0)))
        action = jnp.pad(action, ((0, pad), (0, 0)))
        action_mean = jnp.pad(action_mean, ((0, pad), (0, 0)))

    grid = (padded // tm,)

    def tile_spec(feat):
        # streamed per-batch-tile operand (double-buffered by Pallas)
        return pl.BlockSpec((tm, feat), lambda i: (i, 0))

    def resident_spec(shape):
        # weights/biases: same block every grid step -> stay resident in VMEM
        return pl.BlockSpec(tuple(shape), lambda i: (0, 0))

    in_specs = [
        tile_spec(sd), tile_spec(ad), tile_spec(md),
        resident_spec(w1s.shape), resident_spec(w1a.shape), resident_spec(w1m.shape),
        resident_spec(b1.shape),
        resident_spec(w2.shape), resident_spec(b2.shape),
        resident_spec(w3.shape), resident_spec(b3.shape),
        resident_spec(w4.shape), resident_spec(b4.shape),
        resident_spec(w5_row.shape),
        pl.BlockSpec(memory_space=pltpu.MemorySpace.SMEM),   # b5 scalar
    ]
    out_spec = pl.BlockSpec((tm, 1), lambda i: (i, 0))

    # VMEM budget: resident weights + double-buffered streamed tiles + headroom
    # for the (tm, hidden) intermediates.  Keeps large hidden_dim configs from
    # tripping the default scoped-VMEM limit while staying under 64 MiB (v7x).
    weight_bytes = 4 * (w1.size + b1.size + w2.size + b2.size + w3.size + b3.size
                        + w4.size + b4.size + w5.size + b5.size)
    stream_bytes = 2 * 4 * tm * (sd + ad + md + 1)          # 2x double-buffer
    work_bytes = 4 * 4 * tm * hidden                        # live intermediates
    vmem_limit = min(64 << 20, max(32 << 20, weight_bytes + stream_bytes
                                   + work_bytes + (4 << 20)))

    in_dim = sd + ad + md
    flops = 2 * padded * (in_dim * hidden + 3 * hidden * hidden + hidden)
    bytes_accessed = 4 * (padded * (in_dim + 1)) + weight_bytes
    cost = pl.CostEstimate(flops=flops, transcendentals=0,
                           bytes_accessed=bytes_accessed)

    out = pl.pallas_call(
        critic_mfg_kernel,
        out_shape=jax.ShapeDtypeStruct((padded, 1), jnp.float32),
        grid=grid,
        in_specs=in_specs,
        out_specs=out_spec,
        compiler_params=pltpu.CompilerParams(
            dimension_semantics=("parallel",),   # megacore sharding on v7x
            vmem_limit_bytes=int(vmem_limit)),
        cost_estimate=cost,
    )(state, action, action_mean,
      w1s, w1a, w1m, b1, w2, b2, w3, b3, w4, b4, w5_row, b5_s)

    return out[:batch]


def init_critic_params(key, state_dim, action_dim, action_mean_dim, hidden_dim,
                       init_w=0.003):
    """Deterministic init mirroring nn.Linear defaults + the uniform_(-init_w, init_w)
    override on linear5. Weights stored as (in, out)."""
    dims = [
        (state_dim + action_dim + action_mean_dim, hidden_dim),  # linear1
        (hidden_dim, hidden_dim),                                # linear2
        (hidden_dim, hidden_dim),                                # linear3
        (hidden_dim, hidden_dim),                                # linear4
        (hidden_dim, 1),                                         # linear5
    ]
    params = []
    keys = jax.random.split(key, 2 * len(dims))
    for i, (fan_in, fan_out) in enumerate(dims):
        if i == len(dims) - 1:
            bound = init_w  # linear5.weight/bias.uniform_(-init_w, init_w)
        else:
            bound = 1.0 / jnp.sqrt(jnp.float32(fan_in))  # torch default
        w = jax.random.uniform(keys[2 * i], (fan_in, fan_out),
                               minval=-bound, maxval=bound, dtype=jnp.float32)
        b = jax.random.uniform(keys[2 * i + 1], (1, fan_out),
                               minval=-bound, maxval=bound, dtype=jnp.float32)
        params.append((w, b))
    return params


def critic_mfg_reference(state, action, action_mean, params):
    """Pure-JAX reference for correctness checking."""
    x = jnp.abs(jnp.concatenate([state, action, action_mean], axis=1))
    (w1, b1), (w2, b2), (w3, b3), (w4, b4), (w5, b5) = params
    x = jnp.maximum(x @ w1 + b1, 0.0)
    x = jnp.maximum(x @ w2 + b2, 0.0)
    x = jnp.maximum(x @ w3 + b3, 0.0)
    x = jnp.maximum(x @ w4 + b4, 0.0)
    x = x @ w5 + b5
    return jnp.abs(x)


if __name__ == "__main__":
    # small shapes consistent with the module's forward
    batch = 2
    state_dim = 8
    action_dim = 4
    action_mean_dim = 4
    hidden_dim = 32

    key = jax.random.PRNGKey(0)
    k_s, k_a, k_m, k_p, k_s2, k_a2, k_m2 = jax.random.split(key, 7)

    state = jax.random.normal(k_s, (batch, state_dim), dtype=jnp.float32)
    action = jax.random.normal(k_a, (batch, action_dim), dtype=jnp.float32)
    action_mean = jax.random.normal(k_m, (batch, action_mean_dim), dtype=jnp.float32)

    params = init_critic_params(k_p, state_dim, action_dim, action_mean_dim,
                                hidden_dim, init_w=0.003)

    out = jax.block_until_ready(
        critic_mfg_forward(state, action, action_mean, params))
    ref = critic_mfg_reference(state, action, action_mean, params)
    assert out.shape == (batch, 1)
    assert jnp.allclose(out, ref, atol=1e-5, rtol=1e-5), "mismatch vs reference"

    # Second check: exercises the multi-tile grid + batch-padding path.
    batch2 = 300
    state2 = jax.random.normal(k_s2, (batch2, state_dim), dtype=jnp.float32)
    action2 = jax.random.normal(k_a2, (batch2, action_dim), dtype=jnp.float32)
    mean2 = jax.random.normal(k_m2, (batch2, action_mean_dim), dtype=jnp.float32)
    out2 = jax.block_until_ready(
        critic_mfg_forward(state2, action2, mean2, params, block_m=128))
    ref2 = critic_mfg_reference(state2, action2, mean2, params)
    assert out2.shape == (batch2, 1)
    assert jnp.allclose(out2, ref2, atol=1e-5, rtol=1e-5), "mismatch vs reference (tiled)"

    print("KERNEL_OK")
</pallas_src>

<mosaic_0001>
module attributes {stable_mosaic.version = 11 : i64} {
  func.func @critic_mfg_kernel(%arg0: i32, %arg1: memref<8x8xf32, #tpu.memory_space<vmem>>, %arg2: memref<8x4xf32, #tpu.memory_space<vmem>>, %arg3: memref<8x4xf32, #tpu.memory_space<vmem>>, %arg4: memref<8x32xf32, #tpu.memory_space<vmem>>, %arg5: memref<4x32xf32, #tpu.memory_space<vmem>>, %arg6: memref<4x32xf32, #tpu.memory_space<vmem>>, %arg7: memref<1x32xf32, #tpu.memory_space<vmem>>, %arg8: memref<32x32xf32, #tpu.memory_space<vmem>>, %arg9: memref<1x32xf32, #tpu.memory_space<vmem>>, %arg10: memref<32x32xf32, #tpu.memory_space<vmem>>, %arg11: memref<1x32xf32, #tpu.memory_space<vmem>>, %arg12: memref<32x32xf32, #tpu.memory_space<vmem>>, %arg13: memref<1x32xf32, #tpu.memory_space<vmem>>, %arg14: memref<1x32xf32, #tpu.memory_space<vmem>>, %arg15: memref<1x1xf32, #tpu.memory_space<smem>>, %arg16: memref<8x1xf32, #tpu.memory_space<vmem>>) attributes {dimension_semantics = [#tpu.dimension_semantics<parallel>], iteration_bounds = array<i64: 1>, scalar_prefetch = 0 : i64, scratch_operands = 0 : i64, tpu.core_type = #tpu.core_type<tc>, window_params = [{transform_indices = @transform_0, window_bounds = array<i64: 8, 8>}, {transform_indices = @transform_1, window_bounds = array<i64: 8, 4>}, {transform_indices = @transform_2, window_bounds = array<i64: 8, 4>}, {pipeline_mode = #tpu.pipeline_mode<synchronous>, transform_indices = @transform_3, window_bounds = array<i64: 8, 32>}, {pipeline_mode = #tpu.pipeline_mode<synchronous>, transform_indices = @transform_4, window_bounds = array<i64: 4, 32>}, {pipeline_mode = #tpu.pipeline_mode<synchronous>, transform_indices = @transform_5, window_bounds = array<i64: 4, 32>}, {pipeline_mode = #tpu.pipeline_mode<synchronous>, transform_indices = @transform_6, window_bounds = array<i64: 1, 32>}, {pipeline_mode = #tpu.pipeline_mode<synchronous>, transform_indices = @transform_7, window_bounds = array<i64: 32, 32>}, {pipeline_mode = #tpu.pipeline_mode<synchronous>, transform_indices = @transform_8, window_bounds = array<i64: 1, 32>}, {pipeline_mode = #tpu.pipeline_mode<synchronous>, transform_indices = @transform_9, window_bounds = array<i64: 32, 32>}, {pipeline_mode = #tpu.pipeline_mode<synchronous>, transform_indices = @transform_10, window_bounds = array<i64: 1, 32>}, {pipeline_mode = #tpu.pipeline_mode<synchronous>, transform_indices = @transform_11, window_bounds = array<i64: 32, 32>}, {pipeline_mode = #tpu.pipeline_mode<synchronous>, transform_indices = @transform_12, window_bounds = array<i64: 1, 32>}, {pipeline_mode = #tpu.pipeline_mode<synchronous>, transform_indices = @transform_13, window_bounds = array<i64: 1, 32>}, {transform_indices = @transform_14, window_bounds = array<i64: 1, 1>}, {transform_indices = @transform_15, window_bounds = array<i64: 8, 1>}]} {
    %c0 = arith.constant 0 : index
    %c0_0 = arith.constant 0 : index
    %0 = vector.load %arg1[%c0, %c0_0] : memref<8x8xf32, #tpu.memory_space<vmem>>, vector<8x8xf32>
    %1 = math.absf %0 : vector<8x8xf32>
    %c0_1 = arith.constant 0 : index
    %c0_2 = arith.constant 0 : index
    %2 = vector.load %arg4[%c0_1, %c0_2] : memref<8x32xf32, #tpu.memory_space<vmem>>, vector<8x32xf32>
    %cst = arith.constant dense<0.000000e+00> : vector<8x32xf32>
    %3 = tpu.matmul %1, %2, %cst {dimension_numbers = #tpu.dot_dimension_numbers<[1], [0], [0], [1], [0, 0, 1, 1], [], []>} : vector<8x8xf32>, vector<8x32xf32>, vector<8x32xf32> -> vector<8x32xf32>
    %c0_3 = arith.constant 0 : index
    %c0_4 = arith.constant 0 : index
    %4 = vector.load %arg2[%c0_3, %c0_4] : memref<8x4xf32, #tpu.memory_space<vmem>>, vector<8x4xf32>
    %5 = math.absf %4 : vector<8x4xf32>
    %c0_5 = arith.constant 0 : index
    %c0_6 = arith.constant 0 : index
    %6 = vector.load %arg5[%c0_5, %c0_6] : memref<4x32xf32, #tpu.memory_space<vmem>>, vector<4x32xf32>
    %cst_7 = arith.constant dense<0.000000e+00> : vector<8x32xf32>
    %7 = tpu.matmul %5, %6, %cst_7 {dimension_numbers = #tpu.dot_dimension_numbers<[1], [0], [0], [1], [0, 0, 1, 1], [], []>} : vector<8x4xf32>, vector<4x32xf32>, vector<8x32xf32> -> vector<8x32xf32>
    %8 = arith.addf %3, %7 : vector<8x32xf32>
    %c0_8 = arith.constant 0 : index
    %c0_9 = arith.constant 0 : index
    %9 = vector.load %arg3[%c0_8, %c0_9] : memref<8x4xf32, #tpu.memory_space<vmem>>, vector<8x4xf32>
    %10 = math.absf %9 : vector<8x4xf32>
    %c0_10 = arith.constant 0 : index
    %c0_11 = arith.constant 0 : index
    %11 = vector.load %arg6[%c0_10, %c0_11] : memref<4x32xf32, #tpu.memory_space<vmem>>, vector<4x32xf32>
    %cst_12 = arith.constant dense<0.000000e+00> : vector<8x32xf32>
    %12 = tpu.matmul %10, %11, %cst_12 {dimension_numbers = #tpu.dot_dimension_numbers<[1], [0], [0], [1], [0, 0, 1, 1], [], []>} : vector<8x4xf32>, vector<4x32xf32>, vector<8x32xf32> -> vector<8x32xf32>
    %13 = arith.addf %8, %12 : vector<8x32xf32>
    %c0_13 = arith.constant 0 : index
    %c0_14 = arith.constant 0 : index
    %14 = vector.load %arg7[%c0_13, %c0_14] : memref<1x32xf32, #tpu.memory_space<vmem>>, vector<1x32xf32>
    %15 = vector.broadcast %14 : vector<1x32xf32> to vector<8x32xf32>
    %16 = arith.addf %13, %15 : vector<8x32xf32>
    %cst_15 = arith.constant 0.000000e+00 : f32
    %17 = vector.broadcast %cst_15 : f32 to vector<8x32xf32>
    %18 = arith.maximumf %16, %17 : vector<8x32xf32>
    %c0_16 = arith.constant 0 : index
    %c0_17 = arith.constant 0 : index
    %19 = vector.load %arg8[%c0_16, %c0_17] : memref<32x32xf32, #tpu.memory_space<vmem>>, vector<32x32xf32>
    %cst_18 = arith.constant dense<0.000000e+00> : vector<8x32xf32>
    %20 = tpu.matmul %18, %19, %cst_18 {dimension_numbers = #tpu.dot_dimension_numbers<[1], [0], [0], [1], [0, 0, 1, 1], [], []>} : vector<8x32xf32>, vector<32x32xf32>, vector<8x32xf32> -> vector<8x32xf32>
    %c0_19 = arith.constant 0 : index
    %c0_20 = arith.constant 0 : index
    %21 = vector.load %arg9[%c0_19, %c0_20] : memref<1x32xf32, #tpu.memory_space<vmem>>, vector<1x32xf32>
    %22 = vector.broadcast %21 : vector<1x32xf32> to vector<8x32xf32>
    %23 = arith.addf %20, %22 : vector<8x32xf32>
    %cst_21 = arith.constant 0.000000e+00 : f32
    %24 = vector.broadcast %cst_21 : f32 to vector<8x32xf32>
    %25 = arith.maximumf %23, %24 : vector<8x32xf32>
    %c0_22 = arith.constant 0 : index
    %c0_23 = arith.constant 0 : index
    %26 = vector.load %arg10[%c0_22, %c0_23] : memref<32x32xf32, #tpu.memory_space<vmem>>, vector<32x32xf32>
    %cst_24 = arith.constant dense<0.000000e+00> : vector<8x32xf32>
    %27 = tpu.matmul %25, %26, %cst_24 {dimension_numbers = #tpu.dot_dimension_numbers<[1], [0], [0], [1], [0, 0, 1, 1], [], []>} : vector<8x32xf32>, vector<32x32xf32>, vector<8x32xf32> -> vector<8x32xf32>
    %c0_25 = arith.constant 0 : index
    %c0_26 = arith.constant 0 : index
    %28 = vector.load %arg11[%c0_25, %c0_26] : memref<1x32xf32, #tpu.memory_space<vmem>>, vector<1x32xf32>
    %29 = vector.broadcast %28 : vector<1x32xf32> to vector<8x32xf32>
    %30 = arith.addf %27, %29 : vector<8x32xf32>
    %cst_27 = arith.constant 0.000000e+00 : f32
    %31 = vector.broadcast %cst_27 : f32 to vector<8x32xf32>
    %32 = arith.maximumf %30, %31 : vector<8x32xf32>
    %c0_28 = arith.constant 0 : index
    %c0_29 = arith.constant 0 : index
    %33 = vector.load %arg12[%c0_28, %c0_29] : memref<32x32xf32, #tpu.memory_space<vmem>>, vector<32x32xf32>
    %cst_30 = arith.constant dense<0.000000e+00> : vector<8x32xf32>
    %34 = tpu.matmul %32, %33, %cst_30 {dimension_numbers = #tpu.dot_dimension_numbers<[1], [0], [0], [1], [0, 0, 1, 1], [], []>} : vector<8x32xf32>, vector<32x32xf32>, vector<8x32xf32> -> vector<8x32xf32>
    %c0_31 = arith.constant 0 : index
    %c0_32 = arith.constant 0 : index
    %35 = vector.load %arg13[%c0_31, %c0_32] : memref<1x32xf32, #tpu.memory_space<vmem>>, vector<1x32xf32>
    %36 = vector.broadcast %35 : vector<1x32xf32> to vector<8x32xf32>
    %37 = arith.addf %34, %36 : vector<8x32xf32>
    %cst_33 = arith.constant 0.000000e+00 : f32
    %38 = vector.broadcast %cst_33 : f32 to vector<8x32xf32>
    %39 = arith.maximumf %37, %38 : vector<8x32xf32>
    %c0_34 = arith.constant 0 : index
    %c0_35 = arith.constant 0 : index
    %40 = vector.load %arg14[%c0_34, %c0_35] : memref<1x32xf32, #tpu.memory_space<vmem>>, vector<1x32xf32>
    %41 = vector.broadcast %40 : vector<1x32xf32> to vector<8x32xf32>
    %42 = arith.mulf %39, %41 : vector<8x32xf32>
    %cst_36 = arith.constant dense<0.000000e+00> : vector<8xf32>
    %43 = vector.multi_reduction <add>, %42, %cst_36 [1] : vector<8x32xf32> to vector<8xf32>
    %44 = vector.shape_cast %43 : vector<8xf32> to vector<8x1xf32>
    %c0_37 = arith.constant 0 : index
    %c0_38 = arith.constant 0 : index
    %45 = memref.load %arg15[%c0_37, %c0_38] : memref<1x1xf32, #tpu.memory_space<smem>>
    %46 = vector.broadcast %45 : f32 to vector<8x1xf32>
    %47 = arith.addf %44, %46 : vector<8x1xf32>
    %48 = math.absf %47 : vector<8x1xf32>
    %c0_39 = arith.constant 0 : index
    %c0_40 = arith.constant 0 : index
    %49 = vector.load %arg16[%c0_39, %c0_40] : memref<8x1xf32, #tpu.memory_space<vmem>>, vector<8x1xf32>
    tpu.vector_store %arg16[%c0_39, %c0_40], %48 {strides = array<i32>} : memref<8x1xf32, #tpu.memory_space<vmem>>, vector<8x1xf32>,
    return
  }
  func.func @transform_0(%arg0: i32) -> (i32, i32) {
    %c0_i32 = arith.constant 0 : i32
    %c0_i32_0 = arith.constant 0 : i32
    return %arg0, %c0_i32 : i32, i32
  }
  func.func @transform_1(%arg0: i32) -> (i32, i32) {
    %c0_i32 = arith.constant 0 : i32
    %c0_i32_0 = arith.constant 0 : i32
    return %arg0, %c0_i32 : i32, i32
  }
  func.func @transform_2(%arg0: i32) -> (i32, i32) {
    %c0_i32 = arith.constant 0 : i32
    %c0_i32_0 = arith.constant 0 : i32
    return %arg0, %c0_i32 : i32, i32
  }
  func.func @transform_3(%arg0: i32) -> (i32, i32) {
    %c0_i32 = arith.constant 0 : i32
    %c0_i32_0 = arith.constant 0 : i32
    %c0_i32_1 = arith.constant 0 : i32
    return %c0_i32, %c0_i32_0 : i32, i32
  }
  func.func @transform_4(%arg0: i32) -> (i32, i32) {
    %c0_i32 = arith.constant 0 : i32
    %c0_i32_0 = arith.constant 0 : i32
    %c0_i32_1 = arith.constant 0 : i32
    return %c0_i32, %c0_i32_0 : i32, i32
  }
  func.func @transform_5(%arg0: i32) -> (i32, i32) {
    %c0_i32 = arith.constant 0 : i32
    %c0_i32_0 = arith.constant 0 : i32
    %c0_i32_1 = arith.constant 0 : i32
    return %c0_i32, %c0_i32_0 : i32, i32
  }
  func.func @transform_6(%arg0: i32) -> (i32, i32) {
    %c0_i32 = arith.constant 0 : i32
    %c0_i32_0 = arith.constant 0 : i32
    %c0_i32_1 = arith.constant 0 : i32
    return %c0_i32, %c0_i32_0 : i32, i32
  }
  func.func @transform_7(%arg0: i32) -> (i32, i32) {
    %c0_i32 = arith.constant 0 : i32
    %c0_i32_0 = arith.constant 0 : i32
    %c0_i32_1 = arith.constant 0 : i32
    return %c0_i32, %c0_i32_0 : i32, i32
  }
  func.func @transform_8(%arg0: i32) -> (i32, i32) {
    %c0_i32 = arith.constant 0 : i32
    %c0_i32_0 = arith.constant 0 : i32
    %c0_i32_1 = arith.constant 0 : i32
    return %c0_i32, %c0_i32_0 : i32, i32
  }
  func.func @transform_9(%arg0: i32) -> (i32, i32) {
    %c0_i32 = arith.constant 0 : i32
    %c0_i32_0 = arith.constant 0 : i32
    %c0_i32_1 = arith.constant 0 : i32
    return %c0_i32, %c0_i32_0 : i32, i32
  }
  func.func @transform_10(%arg0: i32) -> (i32, i32) {
    %c0_i32 = arith.constant 0 : i32
    %c0_i32_0 = arith.constant 0 : i32
    %c0_i32_1 = arith.constant 0 : i32
    return %c0_i32, %c0_i32_0 : i32, i32
  }
  func.func @transform_11(%arg0: i32) -> (i32, i32) {
    %c0_i32 = arith.constant 0 : i32
    %c0_i32_0 = arith.constant 0 : i32
    %c0_i32_1 = arith.constant 0 : i32
    return %c0_i32, %c0_i32_0 : i32, i32
  }
  func.func @transform_12(%arg0: i32) -> (i32, i32) {
    %c0_i32 = arith.constant 0 : i32
    %c0_i32_0 = arith.constant 0 : i32
    %c0_i32_1 = arith.constant 0 : i32
    return %c0_i32, %c0_i32_0 : i32, i32
  }
  func.func @transform_13(%arg0: i32) -> (i32, i32) {
    %c0_i32 = arith.constant 0 : i32
    %c0_i32_0 = arith.constant 0 : i32
    %c0_i32_1 = arith.constant 0 : i32
    return %c0_i32, %c0_i32_0 : i32, i32
  }
  func.func @transform_14(%arg0: i32) -> (i32, i32) {
    %c0_i32 = arith.constant 0 : i32
    %c0_i32_0 = arith.constant 0 : i32
    %c0_i32_1 = arith.constant 0 : i32
    return %c0_i32, %c0_i32_0 : i32, i32
  }
  func.func @transform_15(%arg0: i32) -> (i32, i32) {
    %c0_i32 = arith.constant 0 : i32
    %c0_i32_0 = arith.constant 0 : i32
    return %arg0, %c0_i32 : i32, i32
  }
}

</mosaic_0001>

<llo_original>
// kernel: tpu_custom_call.1
$region0: #{tpu_custom_call.1}
  #allocation0 [shape = 'u32[]', space=smem, size = 0x4, offset = 0x4, fixed_abs, tag = 'smem constant byte address 0x4 - core index']
  #allocation1 [shape = 'u32[144,128]{1,0:T(1,128)}', space=vmem, size = 0x12000, scoped, tag = 'internal scratch']
  #allocation2 [shape = 'f32[1,1]{1,0:T(1,128)S(6)}', space=smem, size = 0x200, scoped, tag = 'scoped memory for tpu_custom_call.1']
  %s0 = inlined_call_operand.hbm [shape: f32[8,8], index: 0, kind: input, shape index: {}]
  %s1 = inlined_call_operand.vmem [shape: f32[8,4], index: 1, kind: input, shape index: {}]
  %s2 = inlined_call_operand.vmem [shape: f32[8,4], index: 2, kind: input, shape index: {}]
  %s3 = inlined_call_operand.hbm [shape: f32[8,32], index: 3, kind: input, shape index: {}]
  %s4 = inlined_call_operand.hbm [shape: f32[4,32], index: 4, kind: input, shape index: {}]
  %s5 = inlined_call_operand.hbm [shape: f32[4,32], index: 5, kind: input, shape index: {}]
  %s6 = inlined_call_operand.vmem [shape: f32[1,32], index: 6, kind: input, shape index: {}]
  %s7 = inlined_call_operand.vmem [shape: f32[32,32], index: 7, kind: input, shape index: {}]
  %s8 = inlined_call_operand.hbm [shape: f32[1,32], index: 8, kind: input, shape index: {}]
  %s9 = inlined_call_operand.hbm [shape: f32[32,32], index: 9, kind: input, shape index: {}]
  %s10 = inlined_call_operand.hbm [shape: f32[1,32], index: 10, kind: input, shape index: {}]
  %s11 = inlined_call_operand.vmem [shape: f32[32,32], index: 11, kind: input, shape index: {}]
  %s12 = inlined_call_operand.vmem [shape: f32[1,32], index: 12, kind: input, shape index: {}]
  %s13 = inlined_call_operand.vmem [shape: f32[1,32], index: 13, kind: input, shape index: {}]
  %s14 = inlined_call_operand.<no memory space> [shape: f32[1,1], index: 14, kind: input, shape index: {}]
  %s15 = inlined_call_operand.vmem [shape: f32[8,1], index: 15, kind: output, shape index: {}]
  %s16 = sld [smem:[#allocation0]]
  $region98: #{tpu_custom_call.1} parent=0
    _
  %s18 = ssub.s32 1, %s16
  %s19 = scalar_select 0, %s18, %s16
  %20 = sst [smem:[#allocation2]] %s14
  $region1: #{tpu_custom_call.1} parent=0
    #allocation3 [shape = 'u8[4096]{0}', space=vmem, size = 0x1000, scoped, tag = 'input window, operand 0, single buffered']
    #allocation4 [shape = 's32[1]{0}', space=sflag, size = 0x4, scoped, tag = 'scoped memory for tpu_custom_call.1']
    #allocation5 [shape = 'u8[4096]{0}', space=vmem, size = 0x1000, scoped, tag = 'input window, operand 3, single buffered']
    #allocation6 [shape = 's32[1]{0}', space=sflag, size = 0x4, scoped, tag = 'scoped memory for tpu_custom_call.1']
    #allocation7 [shape = 'u8[2048]{0}', space=vmem, size = 0x800, scoped, tag = 'input window, operand 4, single buffered']
    #allocation8 [shape = 'u8[2048]{0}', space=vmem, size = 0x800, scoped, tag = 'input window, operand 5, single buffered']
    #allocation9 [shape = 's32[1]{0}', space=sflag, size = 0x4, scoped, tag = 'scoped memory for tpu_custom_call.1']
    #allocation10 [shape = 'u8[512]{0}', space=vmem, size = 0x400, scoped, tag = 'input window, operand 8, single buffered']
    #allocation11 [shape = 'u8[16384]{0}', space=vmem, size = 0x4000, scoped, tag = 'input window, operand 9, single buffered']
    #allocation12 [shape = 's32[1]{0}', space=sflag, size = 0x4, scoped, tag = 'scoped memory for tpu_custom_call.1']
    #allocation13 [shape = 'u8[512]{0}', space=vmem, size = 0x400, scoped, tag = 'input window, operand 10, single buffered']
    %21 = vsyncpa [#allocation4], 0
    %22 = vsyncpa [#allocation6], 0
    %23 = vsyncpa [#allocation9], 0
    %24 = vsyncpa [#allocation12], 0
    // Predicated region
    $region2: #{tpu_custom_call.1} parent=1 // pred_check
      _
    $region3: #{tpu_custom_call.1} parent=1 // pred_check_branch
      %26 = sbr.rel (0) target = $region5
    $region4: #{tpu_custom_call.1} parent=1 // pred_region
      %s28 = ssub.s32 128, 128
      %29 = vsyncadd [#allocation4], %s28
      %s31 = sshll.u32 [#allocation3], 4
      %s32 = int_to_ptr.vmem [resolvable:$true] %s31
      %34 = dma.hbm_to_vmem [thread:$0]  %s0, 128, %s32, [#allocation4]
    $region5: #{tpu_custom_call.1} parent=1 // pred_fallthru
      _
    // Predicated region
    $region6: #{tpu_custom_call.1} parent=1 // pred_check
      _
    $region7: #{tpu_custom_call.1} parent=1 // pred_check_branch
      %36 = sbr.rel (0) target = $region9
    $region8: #{tpu_custom_call.1} parent=1 // pred_region
      _
    $region9: #{tpu_custom_call.1} parent=1 // pred_fallthru
      _
    // Predicated region
    $region10: #{tpu_custom_call.1} parent=1 // pred_check
      _
    $region11: #{tpu_custom_call.1} parent=1 // pred_check_branch
      %38 = sbr.rel (0) target = $region13
    $region12: #{tpu_custom_call.1} parent=1 // pred_region
      _
    $region13: #{tpu_custom_call.1} parent=1 // pred_fallthru
      _
    // Predicated region
    $region14: #{tpu_custom_call.1} parent=1 // pred_check
      _
    $region15: #{tpu_custom_call.1} parent=1 // pred_check_branch
      %40 = sbr.rel (0) target = $region17
    $region16: #{tpu_custom_call.1} parent=1 // pred_region
      %s42 = ssub.s32 128, 128
      %43 = vsyncadd [#allocation6], %s42
      %s45 = sshll.u32 [#allocation5], 4
      %s46 = int_to_ptr.vmem [resolvable:$true] %s45
      %48 = dma.hbm_to_vmem [thread:$0]  %s3, 128, %s46, [#allocation6]
    $region17: #{tpu_custom_call.1} parent=1 // pred_fallthru
      _
    // Predicated region
    $region18: #{tpu_custom_call.1} parent=1 // pred_check
      _
    $region19: #{tpu_custom_call.1} parent=1 // pred_check_branch
      %50 = sbr.rel (0) target = $region21
    $region20: #{tpu_custom_call.1} parent=1 // pred_region
      %s52 = ssub.s32 64, 64
      %53 = vsyncadd [#allocation6], %s52
      %s55 = sshll.u32 [#allocation7], 4
      %s56 = int_to_ptr.vmem [resolvable:$true] %s55
      %58 = dma.hbm_to_vmem [thread:$0]  %s4, 64, %s56, [#allocation6]
    $region21: #{tpu_custom_call.1} parent=1 // pred_fallthru
      _
    // Predicated region
    $region22: #{tpu_custom_call.1} parent=1 // pred_check
      _
    $region23: #{tpu_custom_call.1} parent=1 // pred_check_branch
      %60 = sbr.rel (0) target = $region25
    $region24: #{tpu_custom_call.1} parent=1 // pred_region
      %s62 = ssub.s32 64, 64
      %63 = vsyncadd [#allocation9], %s62
      %s65 = sshll.u32 [#allocation8], 4
      %s66 = int_to_ptr.vmem [resolvable:$true] %s65
      %68 = dma.hbm_to_vmem [thread:$0]  %s5, 64, %s66, [#allocation9]
    $region25: #{tpu_custom_call.1} parent=1 // pred_fallthru
      _
    // Predicated region
    $region26: #{tpu_custom_call.1} parent=1 // pred_check
      _
    $region27: #{tpu_custom_call.1} parent=1 // pred_check_branch
      %70 = sbr.rel (0) target = $region29
    $region28: #{tpu_custom_call.1} parent=1 // pred_region
      _
    $region29: #{tpu_custom_call.1} parent=1 // pred_fallthru
      _
    // Predicated region
    $region30: #{tpu_custom_call.1} parent=1 // pred_check
      _
    $region31: #{tpu_custom_call.1} parent=1 // pred_check_branch
      %72 = sbr.rel (0) target = $region33
    $region32: #{tpu_custom_call.1} parent=1 // pred_region
      _
    $region33: #{tpu_custom_call.1} parent=1 // pred_fallthru
      _
    // Predicated region
    $region34: #{tpu_custom_call.1} parent=1 // pred_check
      _
    $region35: #{tpu_custom_call.1} parent=1 // pred_check_branch
      %74 = sbr.rel (0) target = $region37
    $region36: #{tpu_custom_call.1} parent=1 // pred_region
      %s76 = ssub.s32 16, 16
      %77 = vsyncadd [#allocation9], %s76
      %s79 = sshll.u32 [#allocation10], 4
      %s80 = int_to_ptr.vmem [resolvable:$true] %s79
      %82 = dma.hbm_to_vmem [thread:$0]  %s8, 16, %s80, [#allocation9]
    $region37: #{tpu_custom_call.1} parent=1 // pred_fallthru
      _
    // Predicated region
    $region38: #{tpu_custom_call.1} parent=1 // pred_check
      _
    $region39: #{tpu_custom_call.1} parent=1 // pred_check_branch
      %84 = sbr.rel (0) target = $region41
    $region40: #{tpu_custom_call.1} parent=1 // pred_region
      %s86 = ssub.s32 512, 512
      %87 = vsyncadd [#allocation12], %s86
      %s88 = sshll.u32 [#allocation11], 4
      %s89 = int_to_ptr.vmem [resolvable:$true] %s88
      %94 = dma.hbm_to_vmem [thread:$0]  %s9, 512, %s89, [#allocation12], 128, 128, 8
    $region41: #{tpu_custom_call.1} parent=1 // pred_fallthru
      _
    // Predicated region
    $region42: #{tpu_custom_call.1} parent=1 // pred_check
      _
    $region43: #{tpu_custom_call.1} parent=1 // pred_check_branch
      %96 = sbr.rel (0) target = $region45
    $region44: #{tpu_custom_call.1} parent=1 // pred_region
      %s98 = ssub.s32 16, 16
      %99 = vsyncadd [#allocation12], %s98
      %s101 = sshll.u32 [#allocation13], 4
      %s102 = int_to_ptr.vmem [resolvable:$true] %s101
      %104 = dma.hbm_to_vmem [thread:$0]  %s10, 16, %s102, [#allocation12]
    $region45: #{tpu_custom_call.1} parent=1 // pred_fallthru
      _
    // Predicated region
    $region46: #{tpu_custom_call.1} parent=1 // pred_check
      _
    $region47: #{tpu_custom_call.1} parent=1 // pred_check_branch
      %106 = sbr.rel (0) target = $region49
    $region48: #{tpu_custom_call.1} parent=1 // pred_region
      _
    $region49: #{tpu_custom_call.1} parent=1 // pred_fallthru
      _
    // Predicated region
    $region50: #{tpu_custom_call.1} parent=1 // pred_check
      _
    $region51: #{tpu_custom_call.1} parent=1 // pred_check_branch
      %108 = sbr.rel (0) target = $region53
    $region52: #{tpu_custom_call.1} parent=1 // pred_region
      _
    $region53: #{tpu_custom_call.1} parent=1 // pred_fallthru
      _
    // Predicated region
    $region54: #{tpu_custom_call.1} parent=1 // pred_check
      _
    $region55: #{tpu_custom_call.1} parent=1 // pred_check_branch
      %110 = sbr.rel (0) target = $region57
    $region56: #{tpu_custom_call.1} parent=1 // pred_region
      _
    $region57: #{tpu_custom_call.1} parent=1 // pred_fallthru
      _
    // Predicated region
    $region58: #{tpu_custom_call.1} parent=1 // pred_check
      _
    $region59: #{tpu_custom_call.1} parent=1 // pred_check_branch
      %112 = sbr.rel (0) target = $region61
    $region60: #{tpu_custom_call.1} parent=1 // pred_region
      _
    $region61: #{tpu_custom_call.1} parent=1 // pred_fallthru
      _
    // Predicated region
    $region62: #{tpu_custom_call.1} parent=1 // pred_check
      _
    $region63: #{tpu_custom_call.1} parent=1 // pred_check_branch
      %114 = sbr.rel (0) target = $region65
    $region64: #{tpu_custom_call.1} parent=1 // pred_region
      %115 = dma.done [#allocation4], 128
    $region65: #{tpu_custom_call.1} parent=1 // pred_fallthru
      _
    // Predicated region
    $region66: #{tpu_custom_call.1} parent=1 // pred_check
      _
    $region67: #{tpu_custom_call.1} parent=1 // pred_check_branch
      %117 = sbr.rel (0) target = $region69
    $region68: #{tpu_custom_call.1} parent=1 // pred_region
      %118 = dma.done [#allocation6], 128
    $region69: #{tpu_custom_call.1} parent=1 // pred_fallthru
      _
    // Predicated region
    $region70: #{tpu_custom_call.1} parent=1 // pred_check
      _
    $region71: #{tpu_custom_call.1} parent=1 // pred_check_branch
      %120 = sbr.rel (0) target = $region73
    $region72: #{tpu_custom_call.1} parent=1 // pred_region
      %121 = dma.done [#allocation6], 64
    $region73: #{tpu_custom_call.1} parent=1 // pred_fallthru
      _
    // Predicated region
    $region74: #{tpu_custom_call.1} parent=1 // pred_check
      _
    $region75: #{tpu_custom_call.1} parent=1 // pred_check_branch
      %123 = sbr.rel (0) target = $region77
    $region76: #{tpu_custom_call.1} parent=1 // pred_region
      %124 = dma.done [#allocation9], 64
    $region77: #{tpu_custom_call.1} parent=1 // pred_fallthru
      _
    // Predicated region
    $region78: #{tpu_custom_call.1} parent=1 // pred_check
      _
    $region79: #{tpu_custom_call.1} parent=1 // pred_check_branch
      %126 = sbr.rel (0) target = $region81
    $region80: #{tpu_custom_call.1} parent=1 // pred_region
      %127 = dma.done [#allocation9], 16
    $region81: #{tpu_custom_call.1} parent=1 // pred_fallthru
      _
    // Predicated region
    $region82: #{tpu_custom_call.1} parent=1 // pred_check
      _
    $region83: #{tpu_custom_call.1} parent=1 // pred_check_branch
      %129 = sbr.rel (0) target = $region85
    $region84: #{tpu_custom_call.1} parent=1 // pred_region
      %130 = dma.done [#allocation12], 512
    $region85: #{tpu_custom_call.1} parent=1 // pred_fallthru
      _
    // Predicated region
    $region86: #{tpu_custom_call.1} parent=1 // pred_check
      _
    $region87: #{tpu_custom_call.1} parent=1 // pred_check_branch
      %132 = sbr.rel (0) target = $region89
    $region88: #{tpu_custom_call.1} parent=1 // pred_region
      %133 = dma.done [#allocation12], 16
    $region89: #{tpu_custom_call.1} parent=1 // pred_fallthru
      _
    %v134 = vld [vmem:[#allocation3] sm:$0xff]
    %v135 = vand.u32 2147483647, %v134
    %v136 = vld [vmem:[#allocation5] sm:$0xff]
    %v137 = vld [vmem:[%s1] sm:$0xff]
    %v138 = vand.u32 2147483647, %v137
    %v139 = vld [vmem:[#allocation7] sm:$0xf]
    %vm140 = vcmask 31744
    %v142 = vsel %vm140, %v138, 0
    %vm144 = vcmask 1043456
    %v146 = vsel %vm144, %v139, 0
    %148 = vmatprep.subr.mxu0 0.0
    %149 = vmatpush1.msra.mxu0 %v146
    %150 = vmatprep.subr.mxu0 0.0
    %151 = vmatpush1.msra.mxu0 0.0
    %152 = vmatprep.subr.mxu0 0.0
    %153 = vmatpush1.msra.mxu0 0.0
    %154 = vmatprep.subr.mxu0 0.0
    %155 = vmatpush1.msra.mxu0 0.0
    %156 = vmatprep.subr.mxu0 0.0
    %157 = vmatpush1.msra.mxu0 0.0
    %158 = vmatprep.subr.mxu0 0.0
    %159 = vmatpush1.msra.mxu0 0.0
    %160 = vmatprep.subr.mxu0 0.0
    %161 = vmatpush1.msra.mxu0 0.0
    %162 = vmatprep.subr.mxu0 0.0
    %163 = vmatpush1.msra.mxu0 0.0
    %164 = vmatprep.subr.mxu0 0.0
    %165 = vmatpush1.msra.mxu0 0.0
    %166 = vmatprep.subr.mxu0 0.0
    %167 = vmatpush1.msra.mxu0 0.0
    %168 = vmatprep.subr.mxu0 0.0
    %169 = vmatpush1.msra.mxu0 0.0
    %170 = vmatprep.subr.mxu0 0.0
    %171 = vmatpush1.msra.mxu0 0.0
    %172 = vmatprep.subr.mxu0 0.0
    %173 = vmatpush1.msra.mxu0 0.0
    %174 = vmatprep.subr.mxu0 0.0
    %175 = vmatpush1.msra.mxu0 0.0
    %176 = vmatprep.subr.mxu0 0.0
    %177 = vmatpush1.msra.mxu0 0.0
    %178 = vmatprep.subr.mxu0 0.0
    %179 = vmatpush1.msra.mxu0 0.0
    %180 = vmatprep.subr.mxu0 0.0
    %181 = vmatpush1.msra.mxu0 0.0
    %182 = vmatprep.subr.mxu0 0.0
    %183 = vmatpush1.msra.mxu0 0.0
    %184 = vmatprep.subr.mxu0 0.0
    %185 = vmatpush1.msra.mxu0 0.0
    %186 = vmatprep.subr.mxu0 0.0
    %187 = vmatpush1.msra.mxu0 0.0
    %188 = vmatprep.subr.mxu0 0.0
    %189 = vmatpush1.msra.mxu0 0.0
    %190 = vmatprep.subr.mxu0 0.0
    %191 = vmatpush1.msra.mxu0 0.0
    %192 = vmatprep.subr.mxu0 0.0
    %193 = vmatpush1.msra.mxu0 0.0
    %194 = vmatprep.subr.mxu0 0.0
    %195 = vmatpush1.msra.mxu0 0.0
    %196 = vmatprep.subr.mxu0 0.0
    %197 = vmatpush1.msra.mxu0 0.0
    %198 = vmatprep.subr.mxu0 0.0
    %199 = vmatpush1.msra.mxu0 0.0
    %200 = vmatprep.subr.mxu0 0.0
    %201 = vmatpush1.msra.mxu0 0.0
    %202 = vmatprep.subr.mxu0 0.0
    %203 = vmatpush1.msra.mxu0 0.0
    %204 = vmatprep.subr.mxu0 0.0
    %205 = vmatpush1.msra.mxu0 0.0
    %206 = vmatprep.subr.mxu0 0.0
    %207 = vmatpush1.msra.mxu0 0.0
    %208 = vmatprep.subr.mxu0 0.0
    %209 = vmatpush1.msra.mxu0 0.0
    %210 = vmatprep.subr.mxu0 0.0
    %211 = vmatpush1.msra.mxu0 0.0
    %212 = vmatprep.mubr.f32.mxu0 0.0
    %213 = vmatmul.mubr.f32.gmra.mrb[0].mxu0 %v142
    %v214 = vpop.f32.mrb[0].mxu0
    %v215 = vadd.f32 0.0, %v214
    %v216 = vpop.f32.mrb[0].mxu0
    %217 = vdwg.mxu0
    %vm218 = vcmask 64512
    %v220 = vsel %vm218, %v135, 0
    %222 = vmatprep.subr.mxu0 0.0
    %223 = vmatpush1.msra.mxu0 %v136
    %224 = vmatprep.subr.mxu0 0.0
    %225 = vmatpush1.msra.mxu0 0.0
    %226 = vmatprep.subr.mxu0 0.0
    %227 = vmatpush1.msra.mxu0 0.0
    %228 = vmatprep.subr.mxu0 0.0
    %229 = vmatpush1.msra.mxu0 0.0
    %230 = vmatprep.subr.mxu0 0.0
    %231 = vmatpush1.msra.mxu0 0.0
    %232 = vmatprep.subr.mxu0 0.0
    %233 = vmatpush1.msra.mxu0 0.0
    %234 = vmatprep.subr.mxu0 0.0
    %235 = vmatpush1.msra.mxu0 0.0
    %236 = vmatprep.subr.mxu0 0.0
    %237 = vmatpush1.msra.mxu0 0.0
    %238 = vmatprep.subr.mxu0 0.0
    %239 = vmatpush1.msra.mxu0 0.0
    %240 = vmatprep.subr.mxu0 0.0
    %241 = vmatpush1.msra.mxu0 0.0
    %242 = vmatprep.subr.mxu0 0.0
    %243 = vmatpush1.msra.mxu0 0.0
    %244 = vmatprep.subr.mxu0 0.0
    %245 = vmatpush1.msra.mxu0 0.0
    %246 = vmatprep.subr.mxu0 0.0
    %247 = vmatpush1.msra.mxu0 0.0
    %248 = vmatprep.subr.mxu0 0.0
    %249 = vmatpush1.msra.mxu0 0.0
    %250 = vmatprep.subr.mxu0 0.0
    %251 = vmatpush1.msra.mxu0 0.0
    %252 = vmatprep.subr.mxu0 0.0
    %253 = vmatpush1.msra.mxu0 0.0
    %254 = vmatprep.subr.mxu0 0.0
    %255 = vmatpush1.msra.mxu0 0.0
    %256 = vmatprep.subr.mxu0 0.0
    %257 = vmatpush1.msra.mxu0 0.0
    %258 = vmatprep.subr.mxu0 0.0
    %259 = vmatpush1.msra.mxu0 0.0
    %260 = vmatprep.subr.mxu0 0.0
    %261 = vmatpush1.msra.mxu0 0.0
    %262 = vmatprep.subr.mxu0 0.0
    %263 = vmatpush1.msra.mxu0 0.0
    %264 = vmatprep.subr.mxu0 0.0
    %265 = vmatpush1.msra.mxu0 0.0
    %266 = vmatprep.subr.mxu0 0.0
    %267 = vmatpush1.msra.mxu0 0.0
    %268 = vmatprep.subr.mxu0 0.0
    %269 = vmatpush1.msra.mxu0 0.0
    %270 = vmatprep.subr.mxu0 0.0
    %271 = vmatpush1.msra.mxu0 0.0
    %272 = vmatprep.subr.mxu0 0.0
    %273 = vmatpush1.msra.mxu0 0.0
    %274 = vmatprep.subr.mxu0 0.0
    %275 = vmatpush1.msra.mxu0 0.0
    %276 = vmatprep.subr.mxu0 0.0
    %277 = vmatpush1.msra.mxu0 0.0
    %278 = vmatprep.subr.mxu0 0.0
    %279 = vmatpush1.msra.mxu0 0.0
    %280 = vmatprep.subr.mxu0 0.0
    %281 = vmatpush1.msra.mxu0 0.0
    %282 = vmatprep.subr.mxu0 0.0
    %283 = vmatpush1.msra.mxu0 0.0
    %284 = vmatprep.subr.mxu0 0.0
    %285 = vmatpush1.msra.mxu0 0.0
    %286 = vmatprep.mubr.f32.mxu0 0.0
    %287 = vmatmul.mubr.f32.gmra.mrb[0].mxu0 %v220
    %v288 = vpop.f32.mrb[0].mxu0
    %v289 = vadd.f32 %v215, %v288
    %v290 = vpop.f32.mrb[0].mxu0
    %291 = vdwg.mxu0
    %v292 = vld [vmem:[%s2] sm:$0xff]
    %v293 = vand.u32 2147483647, %v292
    %v294 = vld [vmem:[#allocation8] sm:$0xf]
    %v296 = vsel %vm140, %v293, 0
    %v299 = vsel %vm144, %v294, 0
    %301 = vmatprep.subr.mxu0 0.0
    %302 = vmatpush1.msra.mxu0 %v299
    %303 = vmatprep.subr.mxu0 0.0
    %304 = vmatpush1.msra.mxu0 0.0
    %305 = vmatprep.subr.mxu0 0.0
    %306 = vmatpush1.msra.mxu0 0.0
    %307 = vmatprep.subr.mxu0 0.0
    %308 = vmatpush1.msra.mxu0 0.0
    %309 = vmatprep.subr.mxu0 0.0
    %310 = vmatpush1.msra.mxu0 0.0
    %311 = vmatprep.subr.mxu0 0.0
    %312 = vmatpush1.msra.mxu0 0.0
    %313 = vmatprep.subr.mxu0 0.0
    %314 = vmatpush1.msra.mxu0 0.0
    %315 = vmatprep.subr.mxu0 0.0
    %316 = vmatpush1.msra.mxu0 0.0
    %317 = vmatprep.subr.mxu0 0.0
    %318 = vmatpush1.msra.mxu0 0.0
    %319 = vmatprep.subr.mxu0 0.0
    %320 = vmatpush1.msra.mxu0 0.0
    %321 = vmatprep.subr.mxu0 0.0
    %322 = vmatpush1.msra.mxu0 0.0
    %323 = vmatprep.subr.mxu0 0.0
    %324 = vmatpush1.msra.mxu0 0.0
    %325 = vmatprep.subr.mxu0 0.0
    %326 = vmatpush1.msra.mxu0 0.0
    %327 = vmatprep.subr.mxu0 0.0
    %328 = vmatpush1.msra.mxu0 0.0
    %329 = vmatprep.subr.mxu0 0.0
    %330 = vmatpush1.msra.mxu0 0.0
    %331 = vmatprep.subr.mxu0 0.0
    %332 = vmatpush1.msra.mxu0 0.0
    %333 = vmatprep.subr.mxu0 0.0
    %334 = vmatpush1.msra.mxu0 0.0
    %335 = vmatprep.subr.mxu0 0.0
    %336 = vmatpush1.msra.mxu0 0.0
    %337 = vmatprep.subr.mxu0 0.0
    %338 = vmatpush1.msra.mxu0 0.0
    %339 = vmatprep.subr.mxu0 0.0
    %340 = vmatpush1.msra.mxu0 0.0
    %341 = vmatprep.subr.mxu0 0.0
    %342 = vmatpush1.msra.mxu0 0.0
    %343 = vmatprep.subr.mxu0 0.0
    %344 = vmatpush1.msra.mxu0 0.0
    %345 = vmatprep.subr.mxu0 0.0
    %346 = vmatpush1.msra.mxu0 0.0
    %347 = vmatprep.subr.mxu0 0.0
    %348 = vmatpush1.msra.mxu0 0.0
    %349 = vmatprep.subr.mxu0 0.0
    %350 = vmatpush1.msra.mxu0 0.0
    %351 = vmatprep.subr.mxu0 0.0
    %352 = vmatpush1.msra.mxu0 0.0
    %353 = vmatprep.subr.mxu0 0.0
    %354 = vmatpush1.msra.mxu0 0.0
    %355 = vmatprep.subr.mxu0 0.0
    %356 = vmatpush1.msra.mxu0 0.0
    %357 = vmatprep.subr.mxu0 0.0
    %358 = vmatpush1.msra.mxu0 0.0
    %359 = vmatprep.subr.mxu0 0.0
    %360 = vmatpush1.msra.mxu0 0.0
    %361 = vmatprep.subr.mxu0 0.0
    %362 = vmatpush1.msra.mxu0 0.0
    %363 = vmatprep.subr.mxu0 0.0
    %364 = vmatpush1.msra.mxu0 0.0
    %365 = vmatprep.mubr.f32.mxu0 0.0
    %366 = vmatmul.mubr.f32.gmra.mrb[0].mxu0 %v296
    %v367 = vpop.f32.mrb[0].mxu0
    %v368 = vadd.f32 0.0, %v367
    %v369 = vpop.f32.mrb[0].mxu0
    %370 = vdwg.mxu0
    %v371 = vadd.f32 %v289, %v368
    %v372 = vld [vmem:[%s6] sm:$0x1]
    %v374 = vlaneseq
    %v375 = vshrl.u32 %v374, 7
    %v376 = vsub.s32 0, %v375
    %v377 = vrot.slane %v372, %v376
    %v379 = vadd.f32 %v371, %v377
    %v380 = vmax.f32 %v379, 0.0
    %v381 = vld [vmem:[%s7] sm:$0xff]
    %v382 = vld [vmem:[%s7 + $0x8] sm:$0xff]
    %v383 = vld [vmem:[%s7 + $0x10] sm:$0xff]
    %v384 = vld [vmem:[%s7 + $0x18] sm:$0xff]
    %v385 = vld [vmem:[#allocation10] sm:$0x1]
    %v387 = vlaneseq
    %v388 = vshrl.u32 %v387, 7
    %v389 = vsub.s32 0, %v388
    %v390 = vrot.slane %v385, %v389
    %vm392 = vcmask 261120
    %v394 = vsel %vm392, %v380, 0
    %396 = vmatprep.subr.mxu0 0.0
    %397 = vmatpush1.msra.mxu0 %v381
    %398 = vmatprep.subr.mxu0 0.0
    %399 = vmatpush1.msra.mxu0 %v382
    %400 = vmatprep.subr.mxu0 0.0
    %401 = vmatpush1.msra.mxu0 %v383
    %402 = vmatprep.subr.mxu0 0.0
    %403 = vmatpush1.msra.mxu0 %v384
    %404 = vmatprep.subr.mxu0 0.0
    %405 = vmatpush1.msra.mxu0 0.0
    %406 = vmatprep.subr.mxu0 0.0
    %407 = vmatpush1.msra.mxu0 0.0
    %408 = vmatprep.subr.mxu0 0.0
    %409 = vmatpush1.msra.mxu0 0.0
    %410 = vmatprep.subr.mxu0 0.0
    %411 = vmatpush1.msra.mxu0 0.0
    %412 = vmatprep.subr.mxu0 0.0
    %413 = vmatpush1.msra.mxu0 0.0
    %414 = vmatprep.subr.mxu0 0.0
    %415 = vmatpush1.msra.mxu0 0.0
    %416 = vmatprep.subr.mxu0 0.0
    %417 = vmatpush1.msra.mxu0 0.0
    %418 = vmatprep.subr.mxu0 0.0
    %419 = vmatpush1.msra.mxu0 0.0
    %420 = vmatprep.subr.mxu0 0.0
    %421 = vmatpush1.msra.mxu0 0.0
    %422 = vmatprep.subr.mxu0 0.0
    %423 = vmatpush1.msra.mxu0 0.0
    %424 = vmatprep.subr.mxu0 0.0
    %425 = vmatpush1.msra.mxu0 0.0
    %426 = vmatprep.subr.mxu0 0.0
    %427 = vmatpush1.msra.mxu0 0.0
    %428 = vmatprep.subr.mxu0 0.0
    %429 = vmatpush1.msra.mxu0 0.0
    %430 = vmatprep.subr.mxu0 0.0
    %431 = vmatpush1.msra.mxu0 0.0
    %432 = vmatprep.subr.mxu0 0.0
    %433 = vmatpush1.msra.mxu0 0.0
    %434 = vmatprep.subr.mxu0 0.0
    %435 = vmatpush1.msra.mxu0 0.0
    %436 = vmatprep.subr.mxu0 0.0
    %437 = vmatpush1.msra.mxu0 0.0
    %438 = vmatprep.subr.mxu0 0.0
    %439 = vmatpush1.msra.mxu0 0.0
    %440 = vmatprep.subr.mxu0 0.0
    %441 = vmatpush1.msra.mxu0 0.0
    %442 = vmatprep.subr.mxu0 0.0
    %443 = vmatpush1.msra.mxu0 0.0
    %444 = vmatprep.subr.mxu0 0.0
    %445 = vmatpush1.msra.mxu0 0.0
    %446 = vmatprep.subr.mxu0 0.0
    %447 = vmatpush1.msra.mxu0 0.0
    %448 = vmatprep.subr.mxu0 0.0
    %449 = vmatpush1.msra.mxu0 0.0
    %450 = vmatprep.subr.mxu0 0.0
    %451 = vmatpush1.msra.mxu0 0.0
    %452 = vmatprep.subr.mxu0 0.0
    %453 = vmatpush1.msra.mxu0 0.0
    %454 = vmatprep.subr.mxu0 0.0
    %455 = vmatpush1.msra.mxu0 0.0
    %456 = vmatprep.subr.mxu0 0.0
    %457 = vmatpush1.msra.mxu0 0.0
    %458 = vmatprep.subr.mxu0 0.0
    %459 = vmatpush1.msra.mxu0 0.0
    %460 = vmatprep.mubr.f32.mxu0 0.0
    %461 = vmatmul.mubr.f32.gmra.mrb[0].mxu0 %v394
    %v462 = vpop.f32.mrb[0].mxu0
    %v463 = vadd.f32 %v390, %v462
    %v464 = vpop.f32.mrb[0].mxu0
    %465 = vdwg.mxu0
    %v466 = vmax.f32 %v463, 0.0
    %v467 = vld [vmem:[#allocation11] sm:$0xff]
    %v468 = vld [vmem:[#allocation11 + $0x8] sm:$0xff]
    %v469 = vld [vmem:[#allocation11 + $0x10] sm:$0xff]
    %v470 = vld [vmem:[#allocation11 + $0x18] sm:$0xff]
    %v471 = vld [vmem:[#allocation13] sm:$0x1]
    %v473 = vlaneseq
    %v474 = vshrl.u32 %v473, 7
    %v475 = vsub.s32 0, %v474
    %v476 = vrot.slane %v471, %v475
    %v479 = vsel %vm392, %v466, 0
    %481 = vmatprep.subr.mxu0 0.0
    %482 = vmatpush1.msra.mxu0 %v467
    %483 = vmatprep.subr.mxu0 0.0
    %484 = vmatpush1.msra.mxu0 %v468
    %485 = vmatprep.subr.mxu0 0.0
    %486 = vmatpush1.msra.mxu0 %v469
    %487 = vmatprep.subr.mxu0 0.0
    %488 = vmatpush1.msra.mxu0 %v470
    %489 = vmatprep.subr.mxu0 0.0
    %490 = vmatpush1.msra.mxu0 0.0
    %491 = vmatprep.subr.mxu0 0.0
    %492 = vmatpush1.msra.mxu0 0.0
    %493 = vmatprep.subr.mxu0 0.0
    %494 = vmatpush1.msra.mxu0 0.0
    %495 = vmatprep.subr.mxu0 0.0
    %496 = vmatpush1.msra.mxu0 0.0
    %497 = vmatprep.subr.mxu0 0.0
    %498 = vmatpush1.msra.mxu0 0.0
    %499 = vmatprep.subr.mxu0 0.0
    %500 = vmatpush1.msra.mxu0 0.0
    %501 = vmatprep.subr.mxu0 0.0
    %502 = vmatpush1.msra.mxu0 0.0
    %503 = vmatprep.subr.mxu0 0.0
    %504 = vmatpush1.msra.mxu0 0.0
    %505 = vmatprep.subr.mxu0 0.0
    %506 = vmatpush1.msra.mxu0 0.0
    %507 = vmatprep.subr.mxu0 0.0
    %508 = vmatpush1.msra.mxu0 0.0
    %509 = vmatprep.subr.mxu0 0.0
    %510 = vmatpush1.msra.mxu0 0.0
    %511 = vmatprep.subr.mxu0 0.0
    %512 = vmatpush1.msra.mxu0 0.0
    %513 = vmatprep.subr.mxu0 0.0
    %514 = vmatpush1.msra.mxu0 0.0
    %515 = vmatprep.subr.mxu0 0.0
    %516 = vmatpush1.msra.mxu0 0.0
    %517 = vmatprep.subr.mxu0 0.0
    %518 = vmatpush1.msra.mxu0 0.0
    %519 = vmatprep.subr.mxu0 0.0
    %520 = vmatpush1.msra.mxu0 0.0
    %521 = vmatprep.subr.mxu0 0.0
    %522 = vmatpush1.msra.mxu0 0.0
    %523 = vmatprep.subr.mxu0 0.0
    %524 = vmatpush1.msra.mxu0 0.0
    %525 = vmatprep.subr.mxu0 0.0
    %526 = vmatpush1.msra.mxu0 0.0
    %527 = vmatprep.subr.mxu0 0.0
    %528 = vmatpush1.msra.mxu0 0.0
    %529 = vmatprep.subr.mxu0 0.0
    %530 = vmatpush1.msra.mxu0 0.0
    %531 = vmatprep.subr.mxu0 0.0
    %532 = vmatpush1.msra.mxu0 0.0
    %533 = vmatprep.subr.mxu0 0.0
    %534 = vmatpush1.msra.mxu0 0.0
    %535 = vmatprep.subr.mxu0 0.0
    %536 = vmatpush1.msra.mxu0 0.0
    %537 = vmatprep.subr.mxu0 0.0
    %538 = vmatpush1.msra.mxu0 0.0
    %539 = vmatprep.subr.mxu0 0.0
    %540 = vmatpush1.msra.mxu0 0.0
    %541 = vmatprep.subr.mxu0 0.0
    %542 = vmatpush1.msra.mxu0 0.0
    %543 = vmatprep.subr.mxu0 0.0
    %544 = vmatpush1.msra.mxu0 0.0
    %545 = vmatprep.mubr.f32.mxu0 0.0
    %546 = vmatmul.mubr.f32.gmra.mrb[0].mxu0 %v479
    %v547 = vpop.f32.mrb[0].mxu0
    %v548 = vadd.f32 %v476, %v547
    %v549 = vpop.f32.mrb[0].mxu0
    %550 = vdwg.mxu0
    %v551 = vmax.f32 %v548, 0.0
    %v552 = vld [vmem:[%s11] sm:$0xff]
    %v553 = vld [vmem:[%s11 + $0x8] sm:$0xff]
    %v554 = vld [vmem:[%s11 + $0x10] sm:$0xff]
    %v555 = vld [vmem:[%s11 + $0x18] sm:$0xff]
    %v556 = vld [vmem:[%s12] sm:$0x1]
    %v558 = vlaneseq
    %v559 = vshrl.u32 %v558, 7
    %v560 = vsub.s32 0, %v559
    %v561 = vrot.slane %v556, %v560
    %v564 = vsel %vm392, %v551, 0
    %566 = vmatprep.subr.mxu0 0.0
    %567 = vmatpush1.msra.mxu0 %v552
    %568 = vmatprep.subr.mxu0 0.0
    %569 = vmatpush1.msra.mxu0 %v553
    %570 = vmatprep.subr.mxu0 0.0
    %571 = vmatpush1.msra.mxu0 %v554
    %572 = vmatprep.subr.mxu0 0.0
    %573 = vmatpush1.msra.mxu0 %v555
    %574 = vmatprep.subr.mxu0 0.0
    %575 = vmatpush1.msra.mxu0 0.0
    %576 = vmatprep.subr.mxu0 0.0
    %577 = vmatpush1.msra.mxu0 0.0
    %578 = vmatprep.subr.mxu0 0.0
    %579 = vmatpush1.msra.mxu0 0.0
    %580 = vmatprep.subr.mxu0 0.0
    %581 = vmatpush1.msra.mxu0 0.0
    %582 = vmatprep.subr.mxu0 0.0
    %583 = vmatpush1.msra.mxu0 0.0
    %584 = vmatprep.subr.mxu0 0.0
    %585 = vmatpush1.msra.mxu0 0.0
    %586 = vmatprep.subr.mxu0 0.0
    %587 = vmatpush1.msra.mxu0 0.0
    %588 = vmatprep.subr.mxu0 0.0
    %589 = vmatpush1.msra.mxu0 0.0
    %590 = vmatprep.subr.mxu0 0.0
    %591 = vmatpush1.msra.mxu0 0.0
    %592 = vmatprep.subr.mxu0 0.0
    %593 = vmatpush1.msra.mxu0 0.0
    %594 = vmatprep.subr.mxu0 0.0
    %595 = vmatpush1.msra.mxu0 0.0
    %596 = vmatprep.subr.mxu0 0.0
    %597 = vmatpush1.msra.mxu0 0.0
    %598 = vmatprep.subr.mxu0 0.0
    %599 = vmatpush1.msra.mxu0 0.0
    %600 = vmatprep.subr.mxu0 0.0
    %601 = vmatpush1.msra.mxu0 0.0
    %602 = vmatprep.subr.mxu0 0.0
    %603 = vmatpush1.msra.mxu0 0.0
    %604 = vmatprep.subr.mxu0 0.0
    %605 = vmatpush1.msra.mxu0 0.0
    %606 = vmatprep.subr.mxu0 0.0
    %607 = vmatpush1.msra.mxu0 0.0
    %608 = vmatprep.subr.mxu0 0.0
    %609 = vmatpush1.msra.mxu0 0.0
    %610 = vmatprep.subr.mxu0 0.0
    %611 = vmatpush1.msra.mxu0 0.0
    %612 = vmatprep.subr.mxu0 0.0
    %613 = vmatpush1.msra.mxu0 0.0
    %614 = vmatprep.subr.mxu0 0.0
    %615 = vmatpush1.msra.mxu0 0.0
    %616 = vmatprep.subr.mxu0 0.0
    %617 = vmatpush1.msra.mxu0 0.0
    %618 = vmatprep.subr.mxu0 0.0
    %619 = vmatpush1.msra.mxu0 0.0
    %620 = vmatprep.subr.mxu0 0.0
    %621 = vmatpush1.msra.mxu0 0.0
    %622 = vmatprep.subr.mxu0 0.0
    %623 = vmatpush1.msra.mxu0 0.0
    %624 = vmatprep.subr.mxu0 0.0
    %625 = vmatpush1.msra.mxu0 0.0
    %626 = vmatprep.subr.mxu0 0.0
    %627 = vmatpush1.msra.mxu0 0.0
    %628 = vmatprep.subr.mxu0 0.0
    %629 = vmatpush1.msra.mxu0 0.0
    %630 = vmatprep.mubr.f32.mxu0 0.0
    %631 = vmatmul.mubr.f32.gmra.mrb[0].mxu0 %v564
    %v632 = vpop.f32.mrb[0].mxu0
    %v633 = vadd.f32 %v561, %v632
    %v634 = vpop.f32.mrb[0].mxu0
    %635 = vdwg.mxu0
    %v636 = vmax.f32 %v633, 0.0
    %v637 = vld [vmem:[%s13] sm:$0x1]
    %v639 = vlaneseq
    %v640 = vshrl.u32 %v639, 7
    %v641 = vsub.s32 0, %v640
    %v642 = vrot.slane %v637, %v641
    %v644 = vmul.f32 %v636, %v642
    %v645 = vsel %vm392, %v644, 0.0
    %646 = vadd.xlane.f32.xlu0 %v645
    %v647 = vpop.xlane.xlu0 %646
    %s648 = sld [smem:[#allocation2]]
    %v649 = vstv %s648
    %v650 = vadd.f32 %v647, %v649
    %v651 = vand.u32 2147483647, %v650
    %vm652 = vcmask 7168
    %653 = vst.msk [vmem:[%s15] sm:$0xff] %vm652, %v651
    // Predicated region
    $region90: #{tpu_custom_call.1} parent=1 // pred_check
      _
    $region91: #{tpu_custom_call.1} parent=1 // pred_check_branch
      %655 = sbr.rel (0) target = $region93
    $region92: #{tpu_custom_call.1} parent=1 // pred_region
      _
    $region93: #{tpu_custom_call.1} parent=1 // pred_fallthru
      _
    // Predicated region
    $region94: #{tpu_custom_call.1} parent=1 // pred_check
      _
    $region95: #{tpu_custom_call.1} parent=1 // pred_check_branch
      %657 = sbr.rel (0) target = $region97
    $region96: #{tpu_custom_call.1} parent=1 // pred_region
      _
    $region97: #{tpu_custom_call.1} parent=1 // pred_fallthru
      _
    %658 = vsyncpa [#allocation4], 1
    %659 = vsyncpa [#allocation6], 1
    %660 = vsyncpa [#allocation9], 1
    %661 = vsyncpa [#allocation12], 1

</llo_original>
